<compile_context>
chip_gen: v5e
topology: v5e:2x2
jax: 0.10.0
libtpu: 0.0.40
codegen_flags: <defaults>
</compile_context>

<pallas_src>
import functools
import math

import jax
import jax.numpy as jnp
from jax import lax
from jax.experimental import pallas as pl
from jax.experimental.pallas import tpu as pltpu


# ----------------------------------------------------------------------------
# helpers
# ----------------------------------------------------------------------------
@functools.lru_cache(maxsize=None)
def _vmem_limit_bytes():
    """Generation-aware scoped-VMEM budget (~75% of physical, capped)."""
    try:
        cap = pltpu.get_tpu_info().vmem_capacity_bytes
    except Exception:
        cap = 128 * 1024 * 1024
    return int(min(cap * 3 // 4, 100 * 1024 * 1024))


def _round_up(n, m):
    return ((n + m - 1) // m) * m


def _divisor_tile(n, target, unit=8):
    """Largest multiple-of-`unit` divisor of n that is <= target (falls back to n)."""
    t = min(target, n)
    t -= t % unit
    for cand in range(t, unit - 1, -unit):
        if n % cand == 0:
            return cand
    return n


def _row_tiling(n, target=512):
    """Balanced row tile (multiple of 8) + padded row count for a cdiv-style grid."""
    nt = pl.cdiv(n, target)
    tn = _round_up(pl.cdiv(n, nt), 8)
    return tn, nt * tn


# ----------------------------------------------------------------------------
# Kernel 1: fused (dropout p=0) + residual-add + LayerNorm1 + K/V projection
#   outputs: res1 (f32), normed1 (bf16), K, V per-head-major (B, H, S, hd) bf16
# ----------------------------------------------------------------------------
def _add_ln_kv_kernel(x_ref, r_ref, g_ref, b_ref, wkv_ref, bkv_ref,
                      res_ref, y_ref, k_ref, v_ref, *, eps, n_heads, head_dim):
    x = x_ref[...].astype(jnp.float32)
    r = r_ref[...].astype(jnp.float32)
    new_res = x + r                                    # dropout/drop_path p=0 (eval)
    res_ref[...] = new_res.astype(res_ref.dtype)       # residual_in_fp32=False
    mean = jnp.mean(new_res, axis=-1, keepdims=True)
    centered = new_res - mean
    var = jnp.mean(centered * centered, axis=-1, keepdims=True)
    y = centered * lax.rsqrt(var + eps) * g_ref[...] + b_ref[...]
    y16 = y.astype(jnp.bfloat16)
    y_ref[...] = y16                                    # bf16: MHA/MLP cast anyway

    kv = jnp.dot(y16, wkv_ref[...], preferred_element_type=jnp.float32) + bkv_ref[...]
    kv16 = kv.astype(jnp.bfloat16)
    hhd = n_heads * head_dim
    for h in range(n_heads):                            # one-time scatter into head-major layout
        k_ref[h] = kv16[:, h * head_dim:(h + 1) * head_dim]
        v_ref[h] = kv16[:, hhd + h * head_dim: hhd + (h + 1) * head_dim]


def add_ln_kv(x, residual, gamma, beta, wkv, bkv, eps, *, n_heads, head_dim, seq_tile=256):
    B, S, D = x.shape
    hhd = n_heads * head_dim
    ts = _divisor_tile(S, seq_tile)   # must divide S exactly (K/V cannot be row-padded)
    kernel = functools.partial(_add_ln_kv_kernel, eps=eps,
                               n_heads=n_heads, head_dim=head_dim)
    # TODO(synk): weight/bias BlockSpecs with constant index maps could use
    # pipeline_mode=pl.Buffered(1) to single-buffer; kept default for portability.
    return pl.pallas_call(
        kernel,
        grid=(B, S // ts),
        in_specs=[
            pl.BlockSpec((None, ts, D), lambda b, si: (b, si, 0)),
            pl.BlockSpec((None, ts, D), lambda b, si: (b, si, 0)),
            pl.BlockSpec((1, D), lambda b, si: (0, 0)),
            pl.BlockSpec((1, D), lambda b, si: (0, 0)),
            pl.BlockSpec((D, 2 * hhd), lambda b, si: (0, 0)),
            pl.BlockSpec((1, 2 * hhd), lambda b, si: (0, 0)),
        ],
        out_specs=(
            pl.BlockSpec((None, ts, D), lambda b, si: (b, si, 0)),
            pl.BlockSpec((None, ts, D), lambda b, si: (b, si, 0)),
            pl.BlockSpec((None, n_heads, ts, head_dim), lambda b, si: (b, 0, si, 0)),
            pl.BlockSpec((None, n_heads, ts, head_dim), lambda b, si: (b, 0, si, 0)),
        ),
        out_shape=(
            jax.ShapeDtypeStruct((B, S, D), x.dtype),
            jax.ShapeDtypeStruct((B, S, D), jnp.bfloat16),
            jax.ShapeDtypeStruct((B, n_heads, S, head_dim), jnp.bfloat16),
            jax.ShapeDtypeStruct((B, n_heads, S, head_dim), jnp.bfloat16),
        ),
        compiler_params=pltpu.CompilerParams(
            dimension_semantics=("parallel", "parallel"),
            vmem_limit_bytes=_vmem_limit_bytes(),
        ),
    )(x, residual, gamma.reshape(1, D), beta.reshape(1, D),
      wkv.astype(jnp.bfloat16), bkv.reshape(1, 2 * hhd))


# ----------------------------------------------------------------------------
# Kernel 2: flash-style MHA (non-causal, eval) with fused Q and output projections
# ----------------------------------------------------------------------------
def _attention_kernel(xq_ref, k_ref, v_ref, wq_ref, bq_ref, wo_ref, bo_ref, o_ref,
                      q_scr, m_scr, l_scr, acc_scr, *, n_heads, head_dim, scale):
    ki = pl.program_id(2)
    nk = pl.num_programs(2)
    unroll = min(n_heads, 4)

    @pl.when(ki == 0)
    def _():
        # Fused, lane-dense Q projection for this query tile; fold the softmax scale in.
        q = jnp.dot(xq_ref[...], wq_ref[...], preferred_element_type=jnp.float32)
        q = (q + bq_ref[...]) * scale
        q16 = q.astype(jnp.bfloat16)
        for h in range(n_heads):                 # one-time scatter to head-major scratch
            q_scr[h] = q16[:, h * head_dim:(h + 1) * head_dim]
        m_scr[...] = jnp.full(m_scr.shape, -jnp.inf, m_scr.dtype)
        l_scr[...] = jnp.zeros(l_scr.shape, l_scr.dtype)
        acc_scr[...] = jnp.zeros(acc_scr.shape, acc_scr.dtype)

    # Online-softmax update over this KV tile, per head (leading-axis indexing only).
    # NOTE: per-head matmuls are MXU-narrow for small head_dim; the lane-dense Wq/Wkv/Wo
    # projections carry the MXU work, attention itself is VPU/XLU-bound by design.
    def head_step(h, carry):
        s = lax.dot_general(q_scr[h], k_ref[h], (((1,), (1,)), ((), ())),
                            preferred_element_type=jnp.float32)          # (TQ, TKV)
        m_prev = m_scr[h]
        m_new = jnp.maximum(m_prev, jnp.max(s, axis=-1, keepdims=True))
        alpha = jnp.exp(m_prev - m_new)
        p = jnp.exp(s - m_new)
        l_scr[h] = alpha * l_scr[h] + jnp.sum(p, axis=-1, keepdims=True)
        acc_scr[h] = alpha * acc_scr[h] + jnp.dot(
            p.astype(jnp.bfloat16), v_ref[h], preferred_element_type=jnp.float32)
        m_scr[h] = m_new
        return carry

    lax.fori_loop(0, n_heads, head_step, 0, unroll=unroll)

    @pl.when(ki == nk - 1)
    def _():
        # Output projection: accumulate ctx_h @ Wo[h] per head (no lane concatenate).
        def proj_step(h, out):
            ctx = (acc_scr[h] / l_scr[h]).astype(jnp.bfloat16)            # exact softmax div
            return out + jnp.dot(ctx, wo_ref[h], preferred_element_type=jnp.float32)
        out = lax.fori_loop(0, n_heads, proj_step,
                            jnp.zeros(o_ref.shape, jnp.float32), unroll=unroll)
        o_ref[...] = (out + bo_ref[...]).astype(o_ref.dtype)


def attention(xn, k, v, wq, bq, wo, bo, *, n_heads, head_dim,
              q_tile=256, kv_tile=512, out_dtype=jnp.float32):
    B, S, D = xn.shape
    hhd = n_heads * head_dim
    tq = _divisor_tile(S, q_tile)
    tkv = _divisor_tile(S, kv_tile)
    scale = 1.0 / math.sqrt(head_dim)
    kernel = functools.partial(_attention_kernel, n_heads=n_heads,
                               head_dim=head_dim, scale=scale)
    wo3 = wo.reshape(n_heads, head_dim, D).astype(jnp.bfloat16)
    return pl.pallas_call(
        kernel,
        grid=(B, S // tq, S // tkv),
        in_specs=[
            pl.BlockSpec((None, tq, D), lambda b, qi, ki: (b, qi, 0)),
            pl.BlockSpec((None, n_heads, tkv, head_dim), lambda b, qi, ki: (b, 0, ki, 0)),
            pl.BlockSpec((None, n_heads, tkv, head_dim), lambda b, qi, ki: (b, 0, ki, 0)),
            pl.BlockSpec((D, hhd), lambda b, qi, ki: (0, 0)),
            pl.BlockSpec((1, hhd), lambda b, qi, ki: (0, 0)),
            pl.BlockSpec((n_heads, head_dim, D), lambda b, qi, ki: (0, 0, 0)),
            pl.BlockSpec((1, D), lambda b, qi, ki: (0, 0)),
        ],
        out_specs=pl.BlockSpec((None, tq, D), lambda b, qi, ki: (b, qi, 0)),
        out_shape=jax.ShapeDtypeStruct((B, S, D), out_dtype),
        scratch_shapes=[
            pltpu.VMEM((n_heads, tq, head_dim), jnp.bfloat16),   # Q (head-major)
            pltpu.VMEM((n_heads, tq, 1), jnp.float32),           # m
            pltpu.VMEM((n_heads, tq, 1), jnp.float32),           # l
            pltpu.VMEM((n_heads, tq, head_dim), jnp.float32),    # acc
        ],
        compiler_params=pltpu.CompilerParams(
            dimension_semantics=("parallel", "parallel", "arbitrary"),
            vmem_limit_bytes=_vmem_limit_bytes(),
        ),
    )(xn, k, v, wq.astype(jnp.bfloat16), bq.reshape(1, hhd), wo3, bo.reshape(1, D))


# ----------------------------------------------------------------------------
# Kernel 3: fused (dropout p=0) + residual-add + LayerNorm2 + MLP
#   grid (row-tile, ff-tile): W1/W2 streamed in FF tiles, f32 accumulator in VMEM,
#   normed2 stays in VMEM scratch (never written to HBM).  Emits mlp_out and res2.
# ----------------------------------------------------------------------------
def _add_ln_mlp_kernel(x_ref, r_ref, g_ref, b_ref, w1_ref, b1_ref, w2_ref, b2_ref,
                       out_ref, res_ref, xn_scr, acc_scr, *, eps):
    fi = pl.program_id(1)
    nf = pl.num_programs(1)

    @pl.when(fi == 0)
    def _():
        x = x_ref[...].astype(jnp.float32)
        r = r_ref[...].astype(jnp.float32)
        new_res = x + r                                 # dropout/drop_path p=0 (eval)
        res_ref[...] = new_res.astype(res_ref.dtype)
        mean = jnp.mean(new_res, axis=-1, keepdims=True)
        centered = new_res - mean
        var = jnp.mean(centered * centered, axis=-1, keepdims=True)
        y = centered * lax.rsqrt(var + eps) * g_ref[...] + b_ref[...]
        xn_scr[...] = y.astype(jnp.bfloat16)
        acc_scr[...] = jnp.zeros(acc_scr.shape, acc_scr.dtype)

    h = jnp.dot(xn_scr[...], w1_ref[...], preferred_element_type=jnp.float32) + b1_ref[...]
    # TODO(synk): PyTorch F.gelu defaults to the exact erf form; tanh approximation used
    # for guaranteed Mosaic lowering of the transcendental.
    h = jax.nn.gelu(h, approximate=True).astype(jnp.bfloat16)
    acc_scr[...] += jnp.dot(h, w2_ref[...], preferred_element_type=jnp.float32)

    @pl.when(fi == nf - 1)
    def _():
        out_ref[...] = (acc_scr[...] + b2_ref[...]).astype(out_ref.dtype)


def add_ln_mlp(x, res, gamma, beta, w1, b1, w2, b2, eps, *, row_tile=512, ff_tile=2048):
    N, D = x.shape
    FF = w1.shape[1]
    tn, n_pad = _row_tiling(N, row_tile)                 # cdiv-style grid via row padding
    if n_pad != N:
        x = jnp.pad(x, ((0, n_pad - N), (0, 0)))
        res = jnp.pad(res, ((0, n_pad - N), (0, 0)))
    tff = _divisor_tile(FF, ff_tile, unit=128)           # lane-dim tile: multiple of 128 or full
    kernel = functools.partial(_add_ln_mlp_kernel, eps=eps)
    out, res2 = pl.pallas_call(
        kernel,
        grid=(n_pad // tn, FF // tff),
        in_specs=[
            pl.BlockSpec((tn, D), lambda i, f: (i, 0)),
            pl.BlockSpec((tn, D), lambda i, f: (i, 0)),
            pl.BlockSpec((1, D), lambda i, f: (0, 0)),
            pl.BlockSpec((1, D), lambda i, f: (0, 0)),
            pl.BlockSpec((D, tff), lambda i, f: (0, f)),
            pl.BlockSpec((1, tff), lambda i, f: (0, f)),
            pl.BlockSpec((tff, D), lambda i, f: (f, 0)),
            pl.BlockSpec((1, D), lambda i, f: (0, 0)),
        ],
        out_specs=(
            pl.BlockSpec((tn, D), lambda i, f: (i, 0)),
            pl.BlockSpec((tn, D), lambda i, f: (i, 0)),
        ),
        out_shape=(
            jax.ShapeDtypeStruct((n_pad, D), x.dtype),
            jax.ShapeDtypeStruct((n_pad, D), x.dtype),
        ),
        scratch_shapes=[
            pltpu.VMEM((tn, D), jnp.bfloat16),   # normed2 (stays on-chip)
            pltpu.VMEM((tn, D), jnp.float32),    # MLP output accumulator
        ],
        compiler_params=pltpu.CompilerParams(
            dimension_semantics=("parallel", "arbitrary"),
            vmem_limit_bytes=_vmem_limit_bytes(),
        ),
    )(x, res, gamma.reshape(1, D), beta.reshape(1, D),
      w1.astype(jnp.bfloat16), b1.reshape(1, FF),
      w2.astype(jnp.bfloat16), b2.reshape(1, D))
    if n_pad != N:
        out, res2 = out[:N], res2[:N]
    return out, res2


# ----------------------------------------------------------------------------
# Block forward (prenorm path, eval mode, no MoE / cross-attn / layer_scale)
# ----------------------------------------------------------------------------
def block_forward(hidden_states, residual, params, *, n_heads, head_dim, eps=1e-5):
    B, S, D = hidden_states.shape
    if residual is None:
        # TODO(synk): dedicated no-residual LN variant would avoid this zero read.
        residual = jnp.zeros_like(hidden_states)

    # dropout1 (p=0) + add + norm1, fused with K/V projection
    res1, normed1, k, v = add_ln_kv(
        hidden_states, residual, params["ln1_g"], params["ln1_b"],
        params["wkv"], params["bkv"], eps, n_heads=n_heads, head_dim=head_dim)

    # self-attention (fused Q / output projections, flash-style over KV tiles)
    attn_out = attention(
        normed1, k, v, params["wq"], params["bq"], params["wo"], params["bo"],
        n_heads=n_heads, head_dim=head_dim, out_dtype=hidden_states.dtype)

    # dropout2 (p=0) + add + norm2, fused with the MLP
    out, res2 = add_ln_mlp(
        attn_out.reshape(B * S, D), res1.reshape(B * S, D),
        params["ln2_g"], params["ln2_b"],
        params["w1"], params["b1"], params["w2"], params["b2"], eps)

    return (out.reshape(B, S, D), None, res2.reshape(B, S, D), None)


# ----------------------------------------------------------------------------
# Deterministic parameter init, pure-JAX reference, and run
# ----------------------------------------------------------------------------
def init_params(key, n_embd, n_heads, head_dim, n_inner):
    ks = jax.random.split(key, 10)
    std = 0.02
    hhd = n_heads * head_dim
    return {
        "wq": std * jax.random.normal(ks[0], (n_embd, hhd), jnp.float32),
        "wkv": std * jax.random.normal(ks[1], (n_embd, 2 * hhd), jnp.float32),
        "wo": std * jax.random.normal(ks[3], (hhd, n_embd), jnp.float32),
        "bq": std * jax.random.normal(ks[4], (hhd,), jnp.float32),
        "bkv": std * jax.random.normal(ks[5], (2 * hhd,), jnp.float32),
        "bo": jnp.zeros((n_embd,), jnp.float32),
        "w1": std * jax.random.normal(ks[7], (n_embd, n_inner), jnp.float32),
        "b1": jnp.zeros((n_inner,), jnp.float32),
        "w2": std * jax.random.normal(ks[8], (n_inner, n_embd), jnp.float32),
        "b2": jnp.zeros((n_embd,), jnp.float32),
        "ln1_g": jnp.ones((n_embd,), jnp.float32),
        "ln1_b": jnp.zeros((n_embd,), jnp.float32),
        "ln2_g": jnp.ones((n_embd,), jnp.float32),
        "ln2_b": jnp.zeros((n_embd,), jnp.float32),
    }


def _reference_block(hs, res, p, n_heads, head_dim, eps):
    B, S, D = hs.shape
    hhd = n_heads * head_dim

    def ln(v, g, b):
        mu = jnp.mean(v, -1, keepdims=True)
        var = jnp.mean((v - mu) ** 2, -1, keepdims=True)
        return (v - mu) * lax.rsqrt(var + eps) * g + b

    res1 = hs + res
    n1 = ln(res1, p["ln1_g"], p["ln1_b"])
    q = n1 @ p["wq"] + p["bq"]
    kv = n1 @ p["wkv"] + p["bkv"]
    k, v = kv[..., :hhd], kv[..., hhd:]
    split = lambda t: t.reshape(B, S, n_heads, head_dim).transpose(0, 2, 1, 3)
    qh, kh, vh = split(q), split(k), split(v)
    s = jnp.einsum("bhqd,bhkd->bhqk", qh, kh) / math.sqrt(head_dim)
    ctx = jnp.einsum("bhqk,bhkd->bhqd", jax.nn.softmax(s, axis=-1), vh)
    ctx = ctx.transpose(0, 2, 1, 3).reshape(B, S, hhd)
    attn = ctx @ p["wo"] + p["bo"]
    res2 = attn + res1
    n2 = ln(res2, p["ln2_g"], p["ln2_b"])
    h = jax.nn.gelu(n2 @ p["w1"] + p["b1"], approximate=True)
    out = h @ p["w2"] + p["b2"]
    return out, res2


if __name__ == "__main__":
    B, S, D = 2, 8, 32          # batch, seq, n_embd
    H, HD = 2, 16               # heads, head_dim (H * HD == D)
    FF = 128                    # n_inner
    EPS = 1e-5

    key = jax.random.PRNGKey(0)
    k_h, k_r, k_p = jax.random.split(key, 3)
    hidden_states = jax.random.normal(k_h, (B, S, D), jnp.float32)
    residual = jax.random.normal(k_r, (B, S, D), jnp.float32)
    params = init_params(k_p, D, H, HD, FF)

    hs_out, _, res_out, router_logits = block_forward(
        hidden_states, residual, params, n_heads=H, head_dim=HD, eps=EPS)
    jax.block_until_ready((hs_out, res_out))

    assert hs_out.shape == (B, S, D) and res_out.shape == (B, S, D)
    assert router_logits is None

    # loose sanity check vs pure-JAX fp32 reference (kernels run matmuls in bf16)
    ref_out, ref_res = _reference_block(hidden_states, residual, params, H, HD, EPS)
    assert jnp.allclose(hs_out, ref_out, atol=3e-2, rtol=3e-2)
    assert jnp.allclose(res_out, ref_res, atol=3e-2, rtol=3e-2)

    print("KERNEL_OK")
</pallas_src>

<mosaic_0001>
module attributes {stable_mosaic.version = 11 : i64} {
  func.func @_add_ln_kv_kernel(%arg0: i32, %arg1: i32, %arg2: memref<1x8x32xf32, #tpu.memory_space<vmem>>, %arg3: memref<1x8x32xf32, #tpu.memory_space<vmem>>, %arg4: memref<1x32xf32, #tpu.memory_space<vmem>>, %arg5: memref<1x32xf32, #tpu.memory_space<vmem>>, %arg6: memref<32x64xbf16, #tpu.memory_space<vmem>>, %arg7: memref<1x64xf32, #tpu.memory_space<vmem>>, %arg8: memref<1x8x32xf32, #tpu.memory_space<vmem>>, %arg9: memref<1x8x32xbf16, #tpu.memory_space<vmem>>, %arg10: memref<1x2x8x16xbf16, #tpu.memory_space<vmem>>, %arg11: memref<1x2x8x16xbf16, #tpu.memory_space<vmem>>) attributes {dimension_semantics = [#tpu.dimension_semantics<parallel>, #tpu.dimension_semantics<parallel>], iteration_bounds = array<i64: 2, 1>, scalar_prefetch = 0 : i64, scratch_operands = 0 : i64, tpu.core_type = #tpu.core_type<tc>, window_params = [{transform_indices = @transform_0, window_bounds = array<i64: 1, 8, 32>}, {transform_indices = @transform_1, window_bounds = array<i64: 1, 8, 32>}, {pipeline_mode = #tpu.pipeline_mode<synchronous>, transform_indices = @transform_2, window_bounds = array<i64: 1, 32>}, {pipeline_mode = #tpu.pipeline_mode<synchronous>, transform_indices = @transform_3, window_bounds = array<i64: 1, 32>}, {pipeline_mode = #tpu.pipeline_mode<synchronous>, transform_indices = @transform_4, window_bounds = array<i64: 32, 64>}, {pipeline_mode = #tpu.pipeline_mode<synchronous>, transform_indices = @transform_5, window_bounds = array<i64: 1, 64>}, {transform_indices = @transform_6, window_bounds = array<i64: 1, 8, 32>}, {transform_indices = @transform_7, window_bounds = array<i64: 1, 8, 32>}, {transform_indices = @transform_8, window_bounds = array<i64: 1, 2, 8, 16>}, {transform_indices = @transform_9, window_bounds = array<i64: 1, 2, 8, 16>}]} {
    %c0 = arith.constant 0 : index
    %c0_0 = arith.constant 0 : index
    %c0_1 = arith.constant 0 : index
    %0 = vector.load %arg2[%c0, %c0_0, %c0_1] : memref<1x8x32xf32, #tpu.memory_space<vmem>>, vector<1x8x32xf32>
    %1 = vector.shape_cast %0 : vector<1x8x32xf32> to vector<8x32xf32>
    %c0_2 = arith.constant 0 : index
    %c0_3 = arith.constant 0 : index
    %c0_4 = arith.constant 0 : index
    %2 = vector.load %arg3[%c0_2, %c0_3, %c0_4] : memref<1x8x32xf32, #tpu.memory_space<vmem>>, vector<1x8x32xf32>
    %3 = vector.shape_cast %2 : vector<1x8x32xf32> to vector<8x32xf32>
    %4 = arith.addf %1, %3 : vector<8x32xf32>
    %c0_5 = arith.constant 0 : index
    %c0_6 = arith.constant 0 : index
    %c0_7 = arith.constant 0 : index
    %5 = vector.load %arg8[%c0_5, %c0_6, %c0_7] : memref<1x8x32xf32, #tpu.memory_space<vmem>>, vector<1x8x32xf32>
    %6 = vector.shape_cast %5 : vector<1x8x32xf32> to vector<8x32xf32>
    %7 = vector.shape_cast %4 : vector<8x32xf32> to vector<1x8x32xf32>
    tpu.vector_store %arg8[%c0_5, %c0_6, %c0_7], %7 {strides = array<i32>} : memref<1x8x32xf32, #tpu.memory_space<vmem>>, vector<1x8x32xf32>,
    %cst = arith.constant dense<0.000000e+00> : vector<8xf32>
    %8 = vector.multi_reduction <add>, %4, %cst [1] : vector<8x32xf32> to vector<8xf32>
    %9 = vector.shape_cast %8 : vector<8xf32> to vector<8x1xf32>
    %cst_8 = arith.constant 3.200000e+01 : f32
    %10 = vector.broadcast %cst_8 : f32 to vector<8x1xf32>
    %11 = arith.divf %9, %10 : vector<8x1xf32>
    %12 = vector.broadcast %11 : vector<8x1xf32> to vector<8x32xf32>
    %13 = arith.subf %4, %12 : vector<8x32xf32>
    %14 = arith.mulf %13, %13 : vector<8x32xf32>
    %cst_9 = arith.constant dense<0.000000e+00> : vector<8xf32>
    %15 = vector.multi_reduction <add>, %14, %cst_9 [1] : vector<8x32xf32> to vector<8xf32>
    %16 = vector.shape_cast %15 : vector<8xf32> to vector<8x1xf32>
    %cst_10 = arith.constant 3.200000e+01 : f32
    %17 = vector.broadcast %cst_10 : f32 to vector<8x1xf32>
    %18 = arith.divf %16, %17 : vector<8x1xf32>
    %cst_11 = arith.constant 9.99999974E-6 : f32
    %19 = vector.broadcast %cst_11 : f32 to vector<8x1xf32>
    %20 = arith.addf %18, %19 : vector<8x1xf32>
    %21 = math.rsqrt %20 : vector<8x1xf32>
    %22 = vector.broadcast %21 : vector<8x1xf32> to vector<8x32xf32>
    %23 = arith.mulf %13, %22 : vector<8x32xf32>
    %c0_12 = arith.constant 0 : index
    %c0_13 = arith.constant 0 : index
    %24 = vector.load %arg4[%c0_12, %c0_13] : memref<1x32xf32, #tpu.memory_space<vmem>>, vector<1x32xf32>
    %25 = vector.broadcast %24 : vector<1x32xf32> to vector<8x32xf32>
    %26 = arith.mulf %23, %25 : vector<8x32xf32>
    %c0_14 = arith.constant 0 : index
    %c0_15 = arith.constant 0 : index
    %27 = vector.load %arg5[%c0_14, %c0_15] : memref<1x32xf32, #tpu.memory_space<vmem>>, vector<1x32xf32>
    %28 = vector.broadcast %27 : vector<1x32xf32> to vector<8x32xf32>
    %29 = arith.addf %26, %28 : vector<8x32xf32>
    %30 = arith.truncf %29 : vector<8x32xf32> to vector<8x32xbf16>
    %c0_16 = arith.constant 0 : index
    %c0_17 = arith.constant 0 : index
    %c0_18 = arith.constant 0 : index
    %31 = vector.load %arg9[%c0_16, %c0_17, %c0_18] : memref<1x8x32xbf16, #tpu.memory_space<vmem>>, vector<1x8x32xbf16>
    %32 = vector.shape_cast %31 : vector<1x8x32xbf16> to vector<8x32xbf16>
    %33 = vector.shape_cast %30 : vector<8x32xbf16> to vector<1x8x32xbf16>
    tpu.vector_store %arg9[%c0_16, %c0_17, %c0_18], %33 {strides = array<i32>} : memref<1x8x32xbf16, #tpu.memory_space<vmem>>, vector<1x8x32xbf16>,
    %c0_19 = arith.constant 0 : index
    %c0_20 = arith.constant 0 : index
    %34 = vector.load %arg6[%c0_19, %c0_20] : memref<32x64xbf16, #tpu.memory_space<vmem>>, vector<32x64xbf16>
    %cst_21 = arith.constant dense<0.000000e+00> : vector<8x64xf32>
    %35 = tpu.matmul %30, %34, %cst_21 {dimension_numbers = #tpu.dot_dimension_numbers<[1], [0], [0], [1], [0, 0, 1, 1], [], []>} : vector<8x32xbf16>, vector<32x64xbf16>, vector<8x64xf32> -> vector<8x64xf32>
    %c0_22 = arith.constant 0 : index
    %c0_23 = arith.constant 0 : index
    %36 = vector.load %arg7[%c0_22, %c0_23] : memref<1x64xf32, #tpu.memory_space<vmem>>, vector<1x64xf32>
    %37 = vector.broadcast %36 : vector<1x64xf32> to vector<8x64xf32>
    %38 = arith.addf %35, %37 : vector<8x64xf32>
    %39 = arith.truncf %38 : vector<8x64xf32> to vector<8x64xbf16>
    %40 = vector.extract_strided_slice %39 {offsets = [0, 0], sizes = [8, 16], strides = [1, 1]} : vector<8x64xbf16> to vector<8x16xbf16>
    %c0_24 = arith.constant 0 : index
    %c0_25 = arith.constant 0 : index
    %c0_26 = arith.constant 0 : index
    %c0_27 = arith.constant 0 : index
    %41 = vector.load %arg10[%c0_24, %c0_25, %c0_26, %c0_27] : memref<1x2x8x16xbf16, #tpu.memory_space<vmem>>, vector<1x1x8x16xbf16>
    %42 = vector.shape_cast %41 : vector<1x1x8x16xbf16> to vector<8x16xbf16>
    %43 = vector.shape_cast %40 : vector<8x16xbf16> to vector<1x1x8x16xbf16>
    tpu.vector_store %arg10[%c0_24, %c0_25, %c0_26, %c0_27], %43 {strides = array<i32>} : memref<1x2x8x16xbf16, #tpu.memory_space<vmem>>, vector<1x1x8x16xbf16>,
    %44 = vector.extract_strided_slice %39 {offsets = [0, 32], sizes = [8, 16], strides = [1, 1]} : vector<8x64xbf16> to vector<8x16xbf16>
    %c0_28 = arith.constant 0 : index
    %c0_29 = arith.constant 0 : index
    %c0_30 = arith.constant 0 : index
    %c0_31 = arith.constant 0 : index
    %45 = vector.load %arg11[%c0_28, %c0_29, %c0_30, %c0_31] : memref<1x2x8x16xbf16, #tpu.memory_space<vmem>>, vector<1x1x8x16xbf16>
    %46 = vector.shape_cast %45 : vector<1x1x8x16xbf16> to vector<8x16xbf16>
    %47 = vector.shape_cast %44 : vector<8x16xbf16> to vector<1x1x8x16xbf16>
    tpu.vector_store %arg11[%c0_28, %c0_29, %c0_30, %c0_31], %47 {strides = array<i32>} : memref<1x2x8x16xbf16, #tpu.memory_space<vmem>>, vector<1x1x8x16xbf16>,
    %48 = vector.extract_strided_slice %39 {offsets = [0, 16], sizes = [8, 16], strides = [1, 1]} : vector<8x64xbf16> to vector<8x16xbf16>
    %c0_32 = arith.constant 0 : index
    %c1 = arith.constant 1 : index
    %c0_33 = arith.constant 0 : index
    %c0_34 = arith.constant 0 : index
    %49 = vector.load %arg10[%c0_32, %c1, %c0_33, %c0_34] : memref<1x2x8x16xbf16, #tpu.memory_space<vmem>>, vector<1x1x8x16xbf16>
    %50 = vector.shape_cast %49 : vector<1x1x8x16xbf16> to vector<8x16xbf16>
    %51 = vector.shape_cast %48 : vector<8x16xbf16> to vector<1x1x8x16xbf16>
    tpu.vector_store %arg10[%c0_32, %c1, %c0_33, %c0_34], %51 {strides = array<i32>} : memref<1x2x8x16xbf16, #tpu.memory_space<vmem>>, vector<1x1x8x16xbf16>,
    %52 = vector.extract_strided_slice %39 {offsets = [0, 48], sizes = [8, 16], strides = [1, 1]} : vector<8x64xbf16> to vector<8x16xbf16>
    %c0_35 = arith.constant 0 : index
    %c1_36 = arith.constant 1 : index
    %c0_37 = arith.constant 0 : index
    %c0_38 = arith.constant 0 : index
    %53 = vector.load %arg11[%c0_35, %c1_36, %c0_37, %c0_38] : memref<1x2x8x16xbf16, #tpu.memory_space<vmem>>, vector<1x1x8x16xbf16>
    %54 = vector.shape_cast %53 : vector<1x1x8x16xbf16> to vector<8x16xbf16>
    %55 = vector.shape_cast %52 : vector<8x16xbf16> to vector<1x1x8x16xbf16>
    tpu.vector_store %arg11[%c0_35, %c1_36, %c0_37, %c0_38], %55 {strides = array<i32>} : memref<1x2x8x16xbf16, #tpu.memory_space<vmem>>, vector<1x1x8x16xbf16>,
    return
  }
  func.func @transform_0(%arg0: i32, %arg1: i32) -> (i32, i32, i32) {
    %c0_i32 = arith.constant 0 : i32
    %c0_i32_0 = arith.constant 0 : i32
    return %arg0, %arg1, %c0_i32 : i32, i32, i32
  }
  func.func @transform_1(%arg0: i32, %arg1: i32) -> (i32, i32, i32) {
    %c0_i32 = arith.constant 0 : i32
    %c0_i32_0 = arith.constant 0 : i32
    return %arg0, %arg1, %c0_i32 : i32, i32, i32
  }
  func.func @transform_2(%arg0: i32, %arg1: i32) -> (i32, i32) {
    %c0_i32 = arith.constant 0 : i32
    %c0_i32_0 = arith.constant 0 : i32
    %c0_i32_1 = arith.constant 0 : i32
    return %c0_i32, %c0_i32_0 : i32, i32
  }
  func.func @transform_3(%arg0: i32, %arg1: i32) -> (i32, i32) {
    %c0_i32 = arith.constant 0 : i32
    %c0_i32_0 = arith.constant 0 : i32
    %c0_i32_1 = arith.constant 0 : i32
    return %c0_i32, %c0_i32_0 : i32, i32
  }
  func.func @transform_4(%arg0: i32, %arg1: i32) -> (i32, i32) {
    %c0_i32 = arith.constant 0 : i32
    %c0_i32_0 = arith.constant 0 : i32
    %c0_i32_1 = arith.constant 0 : i32
    return %c0_i32, %c0_i32_0 : i32, i32
  }
  func.func @transform_5(%arg0: i32, %arg1: i32) -> (i32, i32) {
    %c0_i32 = arith.constant 0 : i32
    %c0_i32_0 = arith.constant 0 : i32
    %c0_i32_1 = arith.constant 0 : i32
    return %c0_i32, %c0_i32_0 : i32, i32
  }
  func.func @transform_6(%arg0: i32, %arg1: i32) -> (i32, i32, i32) {
    %c0_i32 = arith.constant 0 : i32
    %c0_i32_0 = arith.constant 0 : i32
    return %arg0, %arg1, %c0_i32 : i32, i32, i32
  }
  func.func @transform_7(%arg0: i32, %arg1: i32) -> (i32, i32, i32) {
    %c0_i32 = arith.constant 0 : i32
    %c0_i32_0 = arith.constant 0 : i32
    return %arg0, %arg1, %c0_i32 : i32, i32, i32
  }
  func.func @transform_8(%arg0: i32, %arg1: i32) -> (i32, i32, i32, i32) {
    %c0_i32 = arith.constant 0 : i32
    %c0_i32_0 = arith.constant 0 : i32
    %c0_i32_1 = arith.constant 0 : i32
    return %arg0, %c0_i32, %arg1, %c0_i32_0 : i32, i32, i32, i32
  }
  func.func @transform_9(%arg0: i32, %arg1: i32) -> (i32, i32, i32, i32) {
    %c0_i32 = arith.constant 0 : i32
    %c0_i32_0 = arith.constant 0 : i32
    %c0_i32_1 = arith.constant 0 : i32
    return %arg0, %c0_i32, %arg1, %c0_i32_0 : i32, i32, i32, i32
  }
}

</mosaic_0001>

<llo_original>
// kernel: tpu_custom_call.1
$region0: #{tpu_custom_call.1}
  #allocation0 [shape = 'u32[]', space=smem, size = 0x4, offset = 0x4, fixed_abs, tag = 'smem constant byte address 0x4 - core index']
  #allocation1 [shape = 'u32[72,128]{1,0:T(1,128)}', space=vmem, size = 0x9000, scoped, tag = 'internal scratch']
  %s0 = inlined_call_operand.hbm [shape: f32[2,8,32], index: 0, kind: input, shape index: {}]
  %s1 = inlined_call_operand.hbm [shape: f32[2,8,32], index: 1, kind: input, shape index: {}]
  %s2 = inlined_call_operand.vmem [shape: f32[1,32], index: 2, kind: input, shape index: {}]
  %s3 = inlined_call_operand.vmem [shape: f32[1,32], index: 3, kind: input, shape index: {}]
  %s4 = inlined_call_operand.hbm [shape: bf16[32,64], index: 4, kind: input, shape index: {}]
  %s5 = inlined_call_operand.vmem [shape: f32[1,64], index: 5, kind: input, shape index: {}]
  %s6 = inlined_call_operand.hbm [shape: f32[2,8,32], index: 6, kind: output, shape index: {0}]
  %s7 = inlined_call_operand.hbm [shape: bf16[2,8,32], index: 7, kind: output, shape index: {1}]
  %s8 = inlined_call_operand.hbm [shape: bf16[2,2,8,16], index: 8, kind: output, shape index: {2}]
  %s9 = inlined_call_operand.hbm [shape: bf16[2,2,8,16], index: 9, kind: output, shape index: {3}]
  %10 = xla_tuple %s6, %s7, %s8, %s9
  %s11 = sld [smem:[#allocation0]]
  $region93: #{tpu_custom_call.1} parent=0
    _
  %s13 = ssub.s32 1, %s11
  %s14 = scalar_select 0, %s13, %s11
  $region1: #{tpu_custom_call.1} parent=0
    #allocation2 [shape = 'u8[8192]{0}', space=vmem, size = 0x2000, scoped, tag = 'input window, operand 0']
    #allocation3 [shape = 's32[2]{0}', space=sflag, size = 0x8, scoped, tag = 'scoped memory for tpu_custom_call.1']
    #allocation4 [shape = 's32[2]{0}', space=sflag, size = 0x8, scoped, tag = 'scoped memory for tpu_custom_call.1']
    #allocation5 [shape = 'u8[8192]{0}', space=vmem, size = 0x2000, scoped, tag = 'input window, operand 1']
    #allocation6 [shape = 's32[2]{0}', space=sflag, size = 0x8, scoped, tag = 'scoped memory for tpu_custom_call.1']
    #allocation7 [shape = 'u8[8192]{0}', space=vmem, size = 0x2000, scoped, tag = 'input window, operand 4, single buffered']
    #allocation8 [shape = 'u8[8192]{0}', space=vmem, size = 0x2000, scoped, tag = 'output window, operand 0']
    #allocation9 [shape = 'u8[4096]{0}', space=vmem, size = 0x1000, scoped, tag = 'output window, operand 1']
    #allocation10 [shape = 's32[2]{0}', space=sflag, size = 0x8, scoped, tag = 'scoped memory for tpu_custom_call.1']
    #allocation11 [shape = 'u8[8192]{0}', space=vmem, size = 0x2000, scoped, tag = 'output window, operand 2']
    #allocation12 [shape = 'u8[8192]{0}', space=vmem, size = 0x2000, scoped, tag = 'output window, operand 3']
    #allocation13 [shape = 's32[2]{0}', space=sflag, size = 0x8, scoped, tag = 'scoped memory for tpu_custom_call.1']
    %15 = vsyncpa [#allocation3], 0
    %s16 = scalar_lea.sflag [#allocation3], 1
    %17 = vsyncpa %s16, 0
    %18 = vsyncpa [#allocation6], 0
    %s19 = scalar_lea.sflag [#allocation6], 1
    %20 = vsyncpa %s19, 0
    %21 = vsyncpa [#allocation4], 0
    %s22 = scalar_lea.sflag [#allocation4], 1
    %23 = vsyncpa %s22, 0
    %24 = vsyncpa [#allocation10], 0
    %s25 = scalar_lea.sflag [#allocation10], 1
    %26 = vsyncpa %s25, 0
    %27 = vsyncpa [#allocation13], 0
    %s28 = scalar_lea.sflag [#allocation13], 1
    %29 = vsyncpa %s28, 0
    loop: start=0, step=1, limit=4
    $region2: #{tpu_custom_call.1} parent=1 // loop_pre_header
      _
    $region3: #{tpu_custom_call.1} parent=1 // loop_header
      %s31 = sphi 0, %s35
      %p32 = scmp.ge.s32.totalorder %s31, 4
      %s38 = sphi 0, %s50
      %s39 = sphi 0, %s46
      %s40 = sphi 0, %s38
      %s41 = sphi 0, %s39
      %s42 = sphi 0, %s40
      %s43 = sphi 0, %s41
      %s55 = sphi 0, %s57
      %s58 = sphi 0, %s55
      %s59 = sphi 0, %s58
      %s75 = sphi 0, %s59
      %s83 = sphi 0, %s85
      %s86 = sphi 0, %s83
      %s87 = sphi 0, %s86
      %s103 = sphi 0, %s87
      %s107 = sphi 0, %s107
      %s109 = sphi 0, %s107
      %s110 = sphi 0, %s109
      %s124 = sphi 0, %s110
      %s128 = sphi 0, %s128
      %s130 = sphi 0, %s128
      %s131 = sphi 0, %s130
      %s145 = sphi 0, %s131
      %s149 = sphi 0, %s149
      %s151 = sphi 0, %s149
      %s152 = sphi 0, %s151
      %s166 = sphi 0, %s152
      %s170 = sphi 0, %s170
      %s172 = sphi 0, %s170
      %s173 = sphi 0, %s172
      %s187 = sphi 0, %s173
      %s195 = sphi 0, %s197
      %s198 = sphi 0, %s195
      %s199 = sphi 0, %s198
      %s215 = sphi 0, %s199
      %s223 = sphi 0, %s225
      %s226 = sphi 0, %s223
      %s227 = sphi 0, %s226
      %s243 = sphi 0, %s227
      %s251 = sphi 0, %s253
      %s254 = sphi 0, %s251
      %s255 = sphi 0, %s254
      %s271 = sphi 0, %s255
      %s279 = sphi 0, %s281
      %s282 = sphi 0, %s279
      %s283 = sphi 0, %s282
      %s299 = sphi 0, %s283
    $region4: #{tpu_custom_call.1} parent=1 // loop_header_branch
      %34 = sbr.rel (%p32) target = $region8
    $region5: #{tpu_custom_call.1} parent=1 // loop_body
      %s36 = ssub.s32 %s31, 1
      %s37 = ssub.s32 %s31, 2
      %s44 = sadd.s32 1, %s39
      %p45 = scmp.ge.s32.totalorder %s44, 1
      %s46 = scalar_select %p45, 0, %s44
      %s47 = sadd.s32 1, %s38
      %s48 = scalar_select %p45, %s47, %s38
      %p49 = scmp.ge.s32.totalorder %s48, 2
      %s50 = scalar_select %p49, 0, %s48
      %s51 = ssub.s32 %s38, %s50
      %s52 = ssub.s32 %s39, %s46
      %s53 = sor.u32 %s51, %s52
      %p54 = scmp.eq.s32.totalorder %s53, 0
      %s56 = sadd.s32 %s55, 1
      %s57 = scalar_select %p54, %s55, %s56
      %p60 = pneg %p54
      %p61 = scmp.eq.s32.totalorder %s31, 1
      %p62 = por %p60, %p61
      %p63 = scmp.ne.s32.totalorder %s55, %s58
      %p64 = scmp.eq.s32.totalorder %s31, 0
      %p65 = por %p63, %p64
      %p66 = scmp.ne.s32.totalorder %s55, %s58
      %p67 = scmp.eq.s32.totalorder %s36, 1
      %p68 = por %p66, %p67
      %p69 = scmp.ne.s32.totalorder %s58, %s59
      %p70 = scmp.eq.s32.totalorder %s36, 0
      %p71 = por %p69, %p70
      %p72 = scmp.ne.s32.totalorder %s58, %s59
      %p73 = scmp.eq.s32.totalorder %s37, 1
      %p74 = por %p72, %p73
      %p76 = scmp.ne.s32.totalorder %s59, %s75
      %p77 = scmp.eq.s32.totalorder %s37, 0
      %p78 = por %p76, %p77
      %s79 = ssub.s32 %s38, %s50
      %s80 = ssub.s32 %s39, %s46
      %s81 = sor.u32 %s79, %s80
      %p82 = scmp.eq.s32.totalorder %s81, 0
      %s84 = sadd.s32 %s83, 1
      %s85 = scalar_select %p82, %s83, %s84
      %p88 = pneg %p82
      %p89 = scmp.eq.s32.totalorder %s31, 1
      %p90 = por %p88, %p89
      %p91 = scmp.ne.s32.totalorder %s83, %s86
      %p92 = scmp.eq.s32.totalorder %s31, 0
      %p93 = por %p91, %p92
      %p94 = scmp.ne.s32.totalorder %s83, %s86
      %p95 = scmp.eq.s32.totalorder %s36, 1
      %p96 = por %p94, %p95
      %p97 = scmp.ne.s32.totalorder %s86, %s87
      %p98 = scmp.eq.s32.totalorder %s36, 0
      %p99 = por %p97, %p98
      %p100 = scmp.ne.s32.totalorder %s86, %s87
      %p101 = scmp.eq.s32.totalorder %s37, 1
      %p102 = por %p100, %p101
      %p104 = scmp.ne.s32.totalorder %s87, %s103
      %p105 = scmp.eq.s32.totalorder %s37, 0
      %p106 = por %p104, %p105
      %s108 = sadd.s32 %s107, 1
      %p111 = scmp.eq.s32.totalorder %s31, 1
      %p112 = scmp.ne.s32.totalorder %s107, %s109
      %p113 = scmp.eq.s32.totalorder %s31, 0
      %p114 = por %p112, %p113
      %p115 = scmp.ne.s32.totalorder %s107, %s109
      %p116 = scmp.eq.s32.totalorder %s36, 1
      %p117 = por %p115, %p116
      %p118 = scmp.ne.s32.totalorder %s109, %s110
      %p119 = scmp.eq.s32.totalorder %s36, 0
      %p120 = por %p118, %p119
      %p121 = scmp.ne.s32.totalorder %s109, %s110
      %p122 = scmp.eq.s32.totalorder %s37, 1
      %p123 = por %p121, %p122
      %p125 = scmp.ne.s32.totalorder %s110, %s124
      %p126 = scmp.eq.s32.totalorder %s37, 0
      %p127 = por %p125, %p126
      %s129 = sadd.s32 %s128, 1
      %p132 = scmp.eq.s32.totalorder %s31, 1
      %p133 = scmp.ne.s32.totalorder %s128, %s130
      %p134 = scmp.eq.s32.totalorder %s31, 0
      %p135 = por %p133, %p134
      %p136 = scmp.ne.s32.totalorder %s128, %s130
      %p137 = scmp.eq.s32.totalorder %s36, 1
      %p138 = por %p136, %p137
      %p139 = scmp.ne.s32.totalorder %s130, %s131
      %p140 = scmp.eq.s32.totalorder %s36, 0
      %p141 = por %p139, %p140
      %p142 = scmp.ne.s32.totalorder %s130, %s131
      %p143 = scmp.eq.s32.totalorder %s37, 1
      %p144 = por %p142, %p143
      %p146 = scmp.ne.s32.totalorder %s131, %s145
      %p147 = scmp.eq.s32.totalorder %s37, 0
      %p148 = por %p146, %p147
      %s150 = sadd.s32 %s149, 1
      %p153 = scmp.eq.s32.totalorder %s31, 1
      %p154 = scmp.ne.s32.totalorder %s149, %s151
      %p155 = scmp.eq.s32.totalorder %s31, 0
      %p156 = por %p154, %p155
      %p157 = scmp.ne.s32.totalorder %s149, %s151
      %p158 = scmp.eq.s32.totalorder %s36, 1
      %p159 = por %p157, %p158
      %p160 = scmp.ne.s32.totalorder %s151, %s152
      %p161 = scmp.eq.s32.totalorder %s36, 0
      %p162 = por %p160, %p161
      %p163 = scmp.ne.s32.totalorder %s151, %s152
      %p164 = scmp.eq.s32.totalorder %s37, 1
      %p165 = por %p163, %p164
      %p167 = scmp.ne.s32.totalorder %s152, %s166
      %p168 = scmp.eq.s32.totalorder %s37, 0
      %p169 = por %p167, %p168
      %s171 = sadd.s32 %s170, 1
      %p174 = scmp.eq.s32.totalorder %s31, 1
      %p175 = scmp.ne.s32.totalorder %s170, %s172
      %p176 = scmp.eq.s32.totalorder %s31, 0
      %p177 = por %p175, %p176
      %p178 = scmp.ne.s32.totalorder %s170, %s172
      %p179 = scmp.eq.s32.totalorder %s36, 1
      %p180 = por %p178, %p179
      %p181 = scmp.ne.s32.totalorder %s172, %s173
      %p182 = scmp.eq.s32.totalorder %s36, 0
      %p183 = por %p181, %p182
      %p184 = scmp.ne.s32.totalorder %s172, %s173
      %p185 = scmp.eq.s32.totalorder %s37, 1
      %p186 = por %p184, %p185
      %p188 = scmp.ne.s32.totalorder %s173, %s187
      %p189 = scmp.eq.s32.totalorder %s37, 0
      %p190 = por %p188, %p189
      %s191 = ssub.s32 %s38, %s50
      %s192 = ssub.s32 %s39, %s46
      %s193 = sor.u32 %s191, %s192
      %p194 = scmp.eq.s32.totalorder %s193, 0
      %s196 = sadd.s32 %s195, 1
      %s197 = scalar_select %p194, %s195, %s196
      %p200 = pneg %p194
      %p201 = scmp.eq.s32.totalorder %s31, 1
      %p202 = por %p200, %p201
      %p203 = scmp.ne.s32.totalorder %s195, %s198
      %p204 = scmp.eq.s32.totalorder %s31, 0
      %p205 = por %p203, %p204
      %p206 = scmp.ne.s32.totalorder %s195, %s198
      %p207 = scmp.eq.s32.totalorder %s36, 1
      %p208 = por %p206, %p207
      %p209 = scmp.ne.s32.totalorder %s198, %s199
      %p210 = scmp.eq.s32.totalorder %s36, 0
      %p211 = por %p209, %p210
      %p212 = scmp.ne.s32.totalorder %s198, %s199
      %p213 = scmp.eq.s32.totalorder %s37, 1
      %p214 = por %p212, %p213
      %p216 = scmp.ne.s32.totalorder %s199, %s215
      %p217 = scmp.eq.s32.totalorder %s37, 0
      %p218 = por %p216, %p217
      %s219 = ssub.s32 %s38, %s50
      %s220 = ssub.s32 %s39, %s46
      %s221 = sor.u32 %s219, %s220
      %p222 = scmp.eq.s32.totalorder %s221, 0
      %s224 = sadd.s32 %s223, 1
      %s225 = scalar_select %p222, %s223, %s224
      %p228 = pneg %p222
      %p229 = scmp.eq.s32.totalorder %s31, 1
      %p230 = por %p228, %p229
      %p231 = scmp.ne.s32.totalorder %s223, %s226
      %p232 = scmp.eq.s32.totalorder %s31, 0
      %p233 = por %p231, %p232
      %p234 = scmp.ne.s32.totalorder %s223, %s226
      %p235 = scmp.eq.s32.totalorder %s36, 1
      %p236 = por %p234, %p235
      %p237 = scmp.ne.s32.totalorder %s226, %s227
      %p238 = scmp.eq.s32.totalorder %s36, 0
      %p239 = por %p237, %p238
      %p240 = scmp.ne.s32.totalorder %s226, %s227
      %p241 = scmp.eq.s32.totalorder %s37, 1
      %p242 = por %p240, %p241
      %p244 = scmp.ne.s32.totalorder %s227, %s243
      %p245 = scmp.eq.s32.totalorder %s37, 0
      %p246 = por %p244, %p245
      %s247 = ssub.s32 %s38, %s50
      %s248 = ssub.s32 %s39, %s46
      %s249 = sor.u32 %s247, %s248
      %p250 = scmp.eq.s32.totalorder %s249, 0
      %s252 = sadd.s32 %s251, 1
      %s253 = scalar_select %p250, %s251, %s252
      %p256 = pneg %p250
      %p257 = scmp.eq.s32.totalorder %s31, 1
      %p258 = por %p256, %p257
      %p259 = scmp.ne.s32.totalorder %s251, %s254
      %p260 = scmp.eq.s32.totalorder %s31, 0
      %p261 = por %p259, %p260
      %p262 = scmp.ne.s32.totalorder %s251, %s254
      %p263 = scmp.eq.s32.totalorder %s36, 1
      %p264 = por %p262, %p263
      %p265 = scmp.ne.s32.totalorder %s254, %s255
      %p266 = scmp.eq.s32.totalorder %s36, 0
      %p267 = por %p265, %p266
      %p268 = scmp.ne.s32.totalorder %s254, %s255
      %p269 = scmp.eq.s32.totalorder %s37, 1
      %p270 = por %p268, %p269
      %p272 = scmp.ne.s32.totalorder %s255, %s271
      %p273 = scmp.eq.s32.totalorder %s37, 0
      %p274 = por %p272, %p273
      %s275 = ssub.s32 %s38, %s50
      %s276 = ssub.s32 %s39, %s46
      %s277 = sor.u32 %s275, %s276
      %p278 = scmp.eq.s32.totalorder %s277, 0
      %s280 = sadd.s32 %s279, 1
      %s281 = scalar_select %p278, %s279, %s280
      %p284 = pneg %p278
      %p285 = scmp.eq.s32.totalorder %s31, 1
      %p286 = por %p284, %p285
      %p287 = scmp.ne.s32.totalorder %s279, %s282
      %p288 = scmp.eq.s32.totalorder %s31, 0
      %p289 = por %p287, %p288
      %p290 = scmp.ne.s32.totalorder %s279, %s282
      %p291 = scmp.eq.s32.totalorder %s36, 1
      %p292 = por %p290, %p291
      %p293 = scmp.ne.s32.totalorder %s282, %s283
      %p294 = scmp.eq.s32.totalorder %s36, 0
      %p295 = por %p293, %p294
      %p296 = scmp.ne.s32.totalorder %s282, %s283
      %p297 = scmp.eq.s32.totalorder %s37, 1
      %p298 = por %p296, %p297
      %p300 = scmp.ne.s32.totalorder %s283, %s299
      %p301 = scmp.eq.s32.totalorder %s37, 0
      %p302 = por %p300, %p301
      %p303 = scmp.le.s32.totalorder 1, %s31
      %p304 = scmp.lt.s32.totalorder %s31, 3
      %p305 = pnand %p303, %p304
      %p306 = pneg %p305
      // Predicated region
      $region9: #{tpu_custom_call.1} parent=5 // pred_check
        _
      $region10: #{tpu_custom_call.1} parent=5 // pred_check_branch
        %308 = sbr.rel (%p305) target = $region12
      $region11: #{tpu_custom_call.1} parent=5 // pred_region
        %s309 = ssub.s32 %s31, 1
        // Predicated region
        $region13: #{tpu_custom_call.1} parent=11 // pred_check
          %p310 = pneg %p120
        $region14: #{tpu_custom_call.1} parent=11 // pred_check_branch
          %312 = sbr.rel (%p310) target = $region16
        $region15: #{tpu_custom_call.1} parent=11 // pred_region
          _
        $region16: #{tpu_custom_call.1} parent=11 // pred_fallthru
          _
        // Predicated region
        $region17: #{tpu_custom_call.1} parent=11 // pred_check
          %p313 = pneg %p141
        $region18: #{tpu_custom_call.1} parent=11 // pred_check_branch
          %315 = sbr.rel (%p313) target = $region20
        $region19: #{tpu_custom_call.1} parent=11 // pred_region
          _
        $region20: #{tpu_custom_call.1} parent=11 // pred_fallthru
          _
        // Predicated region
        $region21: #{tpu_custom_call.1} parent=11 // pred_check
          %p316 = pneg %p162
        $region22: #{tpu_custom_call.1} parent=11 // pred_check_branch
          %318 = sbr.rel (%p316) target = $region24
        $region23: #{tpu_custom_call.1} parent=11 // pred_region
          %320 = vsyncadd [#allocation6], 0
          %s321 = sshll.u32 %s4, 4
          %s322 = int_to_ptr.hbm [resolvable:$true] %s321
          %s323 = sshll.u32 [#allocation7], 4
          %s324 = int_to_ptr.vmem [resolvable:$true] %s323
          %329 = dma.hbm_to_vmem [thread:$0]  %s322, 256, %s324, [#allocation6], 64, 64, 4
        $region24: #{tpu_custom_call.1} parent=11 // pred_fallthru
          _
        // Predicated region
        $region25: #{tpu_custom_call.1} parent=11 // pred_check
          %p330 = pneg %p183
        $region26: #{tpu_custom_call.1} parent=11 // pred_check_branch
          %332 = sbr.rel (%p330) target = $region28
        $region27: #{tpu_custom_call.1} parent=11 // pred_region
          _
        $region28: #{tpu_custom_call.1} parent=11 // pred_fallthru
          _
      $region12: #{tpu_custom_call.1} parent=5 // pred_fallthru
        _
      %p333 = scmp.lt.s32.totalorder %s31, 2
      // Predicated region
      $region29: #{tpu_custom_call.1} parent=5 // pred_check
        %p334 = pneg %p333
      $region30: #{tpu_custom_call.1} parent=5 // pred_check_branch
        %336 = sbr.rel (%p334) target = $region32
      $region31: #{tpu_custom_call.1} parent=5 // pred_region
        // Predicated region
        $region33: #{tpu_custom_call.1} parent=31 // pred_check
          %p337 = pneg %p65
        $region34: #{tpu_custom_call.1} parent=31 // pred_check_branch
          %339 = sbr.rel (%p337) target = $region36
        $region35: #{tpu_custom_call.1} parent=31 // pred_region
          %s340 = sand.u32 %s55, 1
          %s341 = scalar_lea.sflag [#allocation3], %s340
          %s342 = sand.u32 %s55, 1
          %s343 = smul.addr %s342, 8
          %s344 = scalar_lea.vmem [#allocation2], %s343
          %346 = vsyncadd %s341, 0
          %s347 = sadd.s32 %s39, %s38
          %s348 = smul.addr %s347, 8
          %s349 = scalar_lea.hbm %s0, %s348
          %s351 = sshll.u32 %s349, 4
          %s352 = int_to_ptr.hbm [resolvable:$true] %s351
          %s353 = sshll.u32 %s344, 4
          %s354 = int_to_ptr.vmem [resolvable:$true] %s353
          %356 = dma.hbm_to_vmem [thread:$0]  %s352, 128, %s354, %s341
        $region36: #{tpu_custom_call.1} parent=31 // pred_fallthru
          _
        // Predicated region
        $region37: #{tpu_custom_call.1} parent=31 // pred_check
          %p357 = pneg %p93
        $region38: #{tpu_custom_call.1} parent=31 // pred_check_branch
          %359 = sbr.rel (%p357) target = $region40
        $region39: #{tpu_custom_call.1} parent=31 // pred_region
          %s360 = sand.u32 %s31, 1
          %s361 = scalar_lea.sflag [#allocation6], %s360
          %s362 = sand.u32 %s83, 1
          %s363 = smul.addr %s362, 8
          %s364 = scalar_lea.vmem [#allocation5], %s363
          %366 = vsyncadd %s361, 0
          %s367 = sadd.s32 %s39, %s38
          %s368 = smul.addr %s367, 8
          %s369 = scalar_lea.hbm %s1, %s368
          %s371 = sshll.u32 %s369, 4
          %s372 = int_to_ptr.hbm [resolvable:$true] %s371
          %s373 = sshll.u32 %s364, 4
          %s374 = int_to_ptr.vmem [resolvable:$true] %s373
          %376 = dma.hbm_to_vmem [thread:$0]  %s372, 128, %s374, %s361
        $region40: #{tpu_custom_call.1} parent=31 // pred_fallthru
          _
      $region32: #{tpu_custom_call.1} parent=5 // pred_fallthru
        _
      %p377 = scmp.le.s32.totalorder 1, %s31
      %p378 = scmp.lt.s32.totalorder %s31, 3
      %p379 = pnand %p377, %p378
      %p380 = pneg %p379
      // Predicated region
      $region41: #{tpu_custom_call.1} parent=5 // pred_check
        _
      $region42: #{tpu_custom_call.1} parent=5 // pred_check_branch
        %382 = sbr.rel (%p379) target = $region44
      $region43: #{tpu_custom_call.1} parent=5 // pred_region
        %s383 = ssub.s32 %s31, 1
        %s384 = sand.u32 %s58, 1
        %s385 = scalar_lea.sflag [#allocation3], %s384
        %s386 = sand.u32 %s58, 1
        %s387 = smul.addr %s386, 8
        %s388 = scalar_lea.vmem [#allocation2], %s387
        // Predicated region
        $region45: #{tpu_custom_call.1} parent=43 // pred_check
          %p389 = pneg %p71
        $region46: #{tpu_custom_call.1} parent=43 // pred_check_branch
          %391 = sbr.rel (%p389) target = $region48
        $region47: #{tpu_custom_call.1} parent=43 // pred_region
          %393 = dma.done %s385, 128
        $region48: #{tpu_custom_call.1} parent=43 // pred_fallthru
          _
        %s394 = sand.u32 %s36, 1
        %s395 = scalar_lea.sflag [#allocation6], %s394
        %s396 = sand.u32 %s86, 1
        %s397 = smul.addr %s396, 8
        %s398 = scalar_lea.vmem [#allocation5], %s397
        // Predicated region
        $region49: #{tpu_custom_call.1} parent=43 // pred_check
          %p399 = pneg %p99
        $region50: #{tpu_custom_call.1} parent=43 // pred_check_branch
          %401 = sbr.rel (%p399) target = $region52
        $region51: #{tpu_custom_call.1} parent=43 // pred_region
          %403 = dma.done %s395, 128
        $region52: #{tpu_custom_call.1} parent=43 // pred_fallthru
          _
        // Predicated region
        $region53: #{tpu_custom_call.1} parent=43 // pred_check
          %p404 = pneg %p162
        $region54: #{tpu_custom_call.1} parent=43 // pred_check_branch
          %406 = sbr.rel (%p404) target = $region56
        $region55: #{tpu_custom_call.1} parent=43 // pred_region
          %408 = dma.done [#allocation6], 256
        $region56: #{tpu_custom_call.1} parent=43 // pred_fallthru
          _
        %s409 = sand.u32 %s58, 1
        %s410 = scalar_lea.sflag [#allocation3], %s409
        %s411 = sand.u32 %s58, 1
        %s412 = smul.addr %s411, 8
        %s413 = scalar_lea.vmem [#allocation2], %s412
        %p414 = pneg %p71
        %p415 = pneg %p68
        %s416 = sand.u32 %s36, 1
        %s417 = scalar_lea.sflag [#allocation6], %s416
        %s418 = sand.u32 %s86, 1
        %s419 = smul.addr %s418, 8
        %s420 = scalar_lea.vmem [#allocation5], %s419
        %p421 = pneg %p99
        %p422 = pneg %p96
        %p423 = pneg %p120
        %p424 = pneg %p117
        %p425 = pneg %p141
        %p426 = pneg %p138
        %p427 = pneg %p162
        %p428 = pneg %p159
        %p429 = pneg %p183
        %p430 = pneg %p180
        %p431 = pneg %p211
        %p432 = pneg %p208
        %s433 = sand.u32 %s198, 1
        %s434 = scalar_lea.sflag [#allocation4], %s433
        %s435 = sand.u32 %s198, 1
        %s436 = smul.addr %s435, 8
        %s437 = scalar_lea.vmem [#allocation8], %s436
        %p438 = pneg %p239
        %p439 = pneg %p236
        %s440 = sand.u32 %s36, 1
        %s441 = scalar_lea.sflag [#allocation10], %s440
        %s442 = sand.u32 %s226, 1
        %s443 = smul.addr %s442, 4
        %s444 = scalar_lea.vmem [#allocation9], %s443
        %p445 = pneg %p267
        %p446 = pneg %p264
        %s447 = sand.u32 %s36, 1
        %s448 = scalar_lea.sflag [#allocation10], %s447
        %s449 = sand.u32 %s254, 1
        %s450 = smul.addr %s449, 8
        %s451 = scalar_lea.vmem [#allocation11], %s450
        %p452 = pneg %p295
        %p453 = pneg %p292
        %s454 = sand.u32 %s282, 1
        %s455 = scalar_lea.sflag [#allocation13], %s454
        %s456 = sand.u32 %s282, 1
        %s457 = smul.addr %s456, 8
        %s458 = scalar_lea.vmem [#allocation12], %s457
        %v460 = vld [vmem:[%s388] sm:$0xff]
        %v461 = vld [vmem:[%s398] sm:$0xff]
        %v462 = vadd.f32 %v460, %v461
        %vm463 = vcmask 261120
        %464 = vst.msk [vmem:[%s437] sm:$0xff] %vm463, %v462
        %v465 = vsel %vm463, %v462, 0.0
        %466 = vadd.xlane.f32.xlu0 %v465
        %v467 = vpop.xlane.xlu0 %466
        %v468 = vrcp.pop 32.0
        %v469 = vmul.f32 32.0, %v468
        %v470 = vsub.f32 1.0, %v469
        %v471 = vmul.f32 %v468, %v470
        %v472 = vadd.f32 %v468, %v471
        %vm473 = vweird.f32 %v468
        %v474 = vsel %vm473, %v468, %v472
        %v475 = vmul.f32 %v467, %v474
        %v476 = vsub.f32 %v462, %v475
        %v477 = vmul.f32 %v476, %v476
        %v478 = vsel %vm463, %v477, 0.0
        %479 = vadd.xlane.f32.xlu0 %v478
        %v480 = vpop.xlane.xlu0 %479
        %v481 = vmul.f32 %v480, %v474
        %v482 = vadd.f32 %v481, 1e-05
        %v483 = vrsqrt.pop %v482
        %v484 = vmul.f32 %v483, %v482
        %v485 = vmul.f32 %v484, %v483
        %v486 = vmul.f32 0.5, %v485
        %v487 = vsub.f32 1.5, %v486
        %v488 = vmul.f32 %v483, %v487
        %vm489 = vweird.f32 %v482
        %vm490 = vweird.f32 %v483
        %vm491 = vmor %vm489, %vm490
        %v492 = vsel %vm491, %v483, %v488
        %v493 = vmul.f32 %v476, %v492
        %v494 = vld [vmem:[%s2] sm:$0x1]
        %v496 = vperm.slane %v494, 0
        %v498 = vmul.f32 %v493, %v496
        %v499 = vld [vmem:[%s3] sm:$0x1]
        %v501 = vperm.slane %v499, 0
        %v503 = vadd.f32 %v498, %v501
        %v504 = vpack.c.bf16 %v503, %v503
        %vm505 = vcmask 257024
        %506 = vst.msk [vmem:[%s444] sm:$0xf] %vm505, %v504
        %v507 = vld [vmem:[#allocation7] sm:$0xf]
        %v508 = vld [vmem:[#allocation7 + $0x4] sm:$0xf]
        %v509 = vld [vmem:[#allocation7 + $0x8] sm:$0xf]
        %v510 = vld [vmem:[#allocation7 + $0xc] sm:$0xf]
        %v511 = vld [vmem:[%s5] sm:$0x1]
        %v513 = vperm.slane %v511, 0
        %v519 = vunpack.c.l.b16 %v507
        %v520 = vunpack.c.l.b16 %v508
        %v521 = vunpack.c.l.b16 %v509
        %v522 = vunpack.c.l.b16 %v510
        %v523 = vpack.c.b16 %v520, %v519
        %v524 = vpack.c.b16 %v522, %v521
        %v528 = vsel %vm463, %v504, 0
        %530 = vmatpush.bf16.msra.mxu0 0
        %531 = vmatpush.bf16.msra.mxu0 0
        %532 = vmatpush.bf16.msra.mxu0 0
        %533 = vmatpush.bf16.msra.mxu0 0
        %534 = vmatpush.bf16.msra.mxu0 0
        %535 = vmatpush.bf16.msra.mxu0 0
        %536 = vmatpush.bf16.msra.mxu0 %v524
        %537 = vmatpush.bf16.msra.mxu0 %v523
        %538 = vmatmul.bf16.gmra.mxu0 %v528
        %v539 = vpop.f32.mrf.mxu0
        %v540 = vadd.f32 %v513, %v539
        %v541 = vpop.f32.mrf.mxu0
        %542 = vdwg.mxu0
        %v543 = vpack.c.bf16 %v540, %v540
        %vm544 = vcmask 125952
        %545 = vst.msk [vmem:[%s451] sm:$0xf] %vm544, %v543
        %547 = vrot.lane.b32.xlu0 %v543, 96
        %v548 = vpop.permute.xlu0 %547
        %550 = vst.msk [vmem:[%s458] sm:$0xf] %vm544, %v548
        %551 = vrot.lane.b32.xlu0 %v543, 112
        %v552 = vpop.permute.xlu0 %551
        %s554 = scalar_lea.vmem %s451, 4 [#allocation11]
        %555 = vst.msk [vmem:[%s554] sm:$0xf] %vm544, %v552
        %556 = vrot.lane.b32.xlu0 %v543, 80
        %v557 = vpop.permute.xlu0 %556
        %s559 = scalar_lea.vmem %s458, 4 [#allocation12]
        %560 = vst.msk [vmem:[%s559] sm:$0xf] %vm544, %v557
        %s561 = sand.u32 %s198, 1
        %s562 = scalar_lea.sflag [#allocation4], %s561
        %s563 = sand.u32 %s198, 1
        %s564 = smul.addr %s563, 8
        %s565 = scalar_lea.vmem [#allocation8], %s564
        %s566 = sand.u32 %s36, 1
        %s567 = scalar_lea.sflag [#allocation10], %s566
        %s568 = sand.u32 %s226, 1
        %s569 = smul.addr %s568, 4
        %s570 = scalar_lea.vmem [#allocation9], %s569
        %s571 = sand.u32 %s36, 1
        %s572 = scalar_lea.sflag [#allocation10], %s571
        %s573 = sand.u32 %s254, 1
        %s574 = smul.addr %s573, 8
        %s575 = scalar_lea.vmem [#allocation11], %s574
        %s576 = sand.u32 %s282, 1
        %s577 = scalar_lea.sflag [#allocation13], %s576
        %s578 = sand.u32 %s282, 1
        %s579 = smul.addr %s578, 8
        %s580 = scalar_lea.vmem [#allocation12], %s579
        // Predicated region
        $region57: #{tpu_custom_call.1} parent=43 // pred_check
          %p581 = pneg %p208
        $region58: #{tpu_custom_call.1} parent=43 // pred_check_branch
          %583 = sbr.rel (%p581) target = $region60
        $region59: #{tpu_custom_call.1} parent=43 // pred_region
          %585 = vsyncadd %s562, 0
          %s586 = sadd.s32 %s41, %s40
          %s587 = smul.addr %s586, 8
          %s588 = scalar_lea.hbm %s6, %s587
          %s590 = sshll.u32 %s565, 4
          %s591 = int_to_ptr.vmem [resolvable:$true] %s590
          %s592 = sshll.u32 %s588, 4
          %s593 = int_to_ptr.hbm [resolvable:$true] %s592
          %595 = dma.vmem_to_hbm [thread:$0]  %s591, 128, %s593, %s562
        $region60: #{tpu_custom_call.1} parent=43 // pred_fallthru
          _
        // Predicated region
        $region61: #{tpu_custom_call.1} parent=43 // pred_check
          %p596 = pneg %p236
        $region62: #{tpu_custom_call.1} parent=43 // pred_check_branch
          %598 = sbr.rel (%p596) target = $region64
        $region63: #{tpu_custom_call.1} parent=43 // pred_region
          %600 = vsyncadd %s567, 0
          %s601 = sadd.s32 %s41, %s40
          %s602 = smul.addr %s601, 4
          %s603 = scalar_lea.hbm %s7, %s602
          %s605 = sshll.u32 %s570, 4
          %s606 = int_to_ptr.vmem [resolvable:$true] %s605
          %s607 = sshll.u32 %s603, 4
          %s608 = int_to_ptr.hbm [resolvable:$true] %s607
          %610 = dma.vmem_to_hbm [thread:$0]  %s606, 64, %s608, %s567
        $region64: #{tpu_custom_call.1} parent=43 // pred_fallthru
          _
        // Predicated region
        $region65: #{tpu_custom_call.1} parent=43 // pred_check
          %p611 = pneg %p264
        $region66: #{tpu_custom_call.1} parent=43 // pred_check_branch
          %613 = sbr.rel (%p611) target = $region68
        $region67: #{tpu_custom_call.1} parent=43 // pred_region
          %615 = vsyncadd %s572, 0
          %s616 = smul.addr %s40, 2
          %s617 = sadd.s32 %s41, %s616
          %s618 = smul.addr %s617, 4
          %s619 = scalar_lea.hbm %s8, %s618
          %s620 = sshll.u32 %s575, 4
          %s621 = int_to_ptr.vmem [resolvable:$true] %s620
          %s622 = sshll.u32 %s619, 4
          %s623 = int_to_ptr.hbm [resolvable:$true] %s622
          %628 = dma.vmem_to_hbm [thread:$0]  %s621, 128, %s623, %s572, 64, 64, 4
        $region68: #{tpu_custom_call.1} parent=43 // pred_fallthru
          _
        // Predicated region
        $region69: #{tpu_custom_call.1} parent=43 // pred_check
          %p629 = pneg %p292
        $region70: #{tpu_custom_call.1} parent=43 // pred_check_branch
          %631 = sbr.rel (%p629) target = $region72
        $region71: #{tpu_custom_call.1} parent=43 // pred_region
          %633 = vsyncadd %s577, 0
          %s634 = smul.addr %s40, 2
          %s635 = sadd.s32 %s41, %s634
          %s636 = smul.addr %s635, 4
          %s637 = scalar_lea.hbm %s9, %s636
          %s638 = sshll.u32 %s580, 4
          %s639 = int_to_ptr.vmem [resolvable:$true] %s638
          %s640 = sshll.u32 %s637, 4
          %s641 = int_to_ptr.hbm [resolvable:$true] %s640
          %646 = dma.vmem_to_hbm [thread:$0]  %s639, 128, %s641, %s577, 64, 64, 4
        $region72: #{tpu_custom_call.1} parent=43 // pred_fallthru
          _
      $region44: #{tpu_custom_call.1} parent=5 // pred_fallthru
        _
      %p647 = scmp.le.s32.totalorder 2, %s31
      // Predicated region
      $region73: #{tpu_custom_call.1} parent=5 // pred_check
        %p648 = pneg %p647
      $region74: #{tpu_custom_call.1} parent=5 // pred_check_branch
        %650 = sbr.rel (%p648) target = $region76
      $region75: #{tpu_custom_call.1} parent=5 // pred_region
        %s651 = ssub.s32 %s31, 2
        // Predicated region
        $region77: #{tpu_custom_call.1} parent=75 // pred_check
          %p652 = pneg %p214
        $region78: #{tpu_custom_call.1} parent=75 // pred_check_branch
          %654 = sbr.rel (%p652) target = $region80
        $region79: #{tpu_custom_call.1} parent=75 // pred_region
          %s655 = sand.u32 %s199, 1
          %s656 = scalar_lea.sflag [#allocation4], %s655
          %s657 = sand.u32 %s199, 1
          %s658 = smul.addr %s657, 8
          %s659 = scalar_lea.vmem [#allocation8], %s658
          %661 = dma.done %s656, 128
        $region80: #{tpu_custom_call.1} parent=75 // pred_fallthru
          _
        // Predicated region
        $region81: #{tpu_custom_call.1} parent=75 // pred_check
          %p662 = pneg %p242
        $region82: #{tpu_custom_call.1} parent=75 // pred_check_branch
          %664 = sbr.rel (%p662) target = $region84
        $region83: #{tpu_custom_call.1} parent=75 // pred_region
          %s665 = sand.u32 %s37, 1
          %s666 = scalar_lea.sflag [#allocation10], %s665
          %s667 = sand.u32 %s227, 1
          %s668 = smul.addr %s667, 4
          %s669 = scalar_lea.vmem [#allocation9], %s668
          %671 = dma.done %s666, 64
        $region84: #{tpu_custom_call.1} parent=75 // pred_fallthru
          _
        // Predicated region
        $region85: #{tpu_custom_call.1} parent=75 // pred_check
          %p672 = pneg %p270
        $region86: #{tpu_custom_call.1} parent=75 // pred_check_branch
          %674 = sbr.rel (%p672) target = $region88
        $region87: #{tpu_custom_call.1} parent=75 // pred_region
          %s675 = sand.u32 %s37, 1
          %s676 = scalar_lea.sflag [#allocation10], %s675
          %s677 = sand.u32 %s255, 1
          %s678 = smul.addr %s677, 8
          %s679 = scalar_lea.vmem [#allocation11], %s678
          %681 = dma.done %s676, 128
        $region88: #{tpu_custom_call.1} parent=75 // pred_fallthru
          _
        // Predicated region
        $region89: #{tpu_custom_call.1} parent=75 // pred_check
          %p682 = pneg %p298
        $region90: #{tpu_custom_call.1} parent=75 // pred_check_branch
          %684 = sbr.rel (%p682) target = $region92
        $region91: #{tpu_custom_call.1} parent=75 // pred_region
          %s685 = sand.u32 %s283, 1
          %s686 = scalar_lea.sflag [#allocation13], %s685
          %s687 = sand.u32 %s283, 1
          %s688 = smul.addr %s687, 8
          %s689 = scalar_lea.vmem [#allocation12], %s688
          %691 = dma.done %s686, 128
        $region92: #{tpu_custom_call.1} parent=75 // pred_fallthru
          _
      $region76: #{tpu_custom_call.1} parent=5 // pred_fallthru
        _
    $region6: #{tpu_custom_call.1} parent=1 // loop_footer
      %s35 = sadd.s32 1, %s31
    $region7: #{tpu_custom_call.1} parent=1 // loop_footer_branch
      %30 = sbr.rel target = $region3
    $region8: #{tpu_custom_call.1} parent=1 // loop_exit
      _
    %692 = vsyncpa [#allocation3], 1
    %s693 = scalar_lea.sflag [#allocation3], 1
    %694 = vsyncpa %s693, 1
    %695 = vsyncpa [#allocation6], 1
    %s696 = scalar_lea.sflag [#allocation6], 1
    %697 = vsyncpa %s696, 1
    %698 = vsyncpa [#allocation4], 1
    %s699 = scalar_lea.sflag [#allocation4], 1
    %700 = vsyncpa %s699, 1
    %701 = vsyncpa [#allocation10], 1
    %s702 = scalar_lea.sflag [#allocation10], 1
    %703 = vsyncpa %s702, 1
    %704 = vsyncpa [#allocation13], 1
    %s705 = scalar_lea.sflag [#allocation13], 1
    %706 = vsyncpa %s705, 1

</llo_original>
